<compile_context>
chip_gen: v7x
topology: tpu7x:2x2x1
jax: 0.10.0
libtpu: 0.0.40
codegen_flags: <defaults>
</compile_context>

<pallas_src>
import functools

import jax
import jax.numpy as jnp
from jax.experimental import pallas as pl
from jax.experimental.pallas import tpu as pltpu


_VMEM_BUDGET_BYTES = 48 * 1024 * 1024   # conservative: fits v7x 64 MiB/TC w/ headroom
_VMEM_CAP_BYTES = 64 * 1024 * 1024      # never ask for more scoped VMEM than v7x has


def _round_up(x: int, m: int) -> int:
    return (x + m - 1) // m * m


def _pick_tile_rows(rows: int, bytes_per_tile_row: int, fixed_bytes: int,
                    budget: int = _VMEM_BUDGET_BYTES) -> int:
    """Largest row tile (multiple of 8, prefer 256-aligned) fitting the VMEM budget."""
    cap = max(8, _round_up(rows, 8))
    best = 8
    for tr in (8, 16, 32, 64, 128, 256, 512, 1024):
        if tr > cap:
            break
        if fixed_bytes + tr * bytes_per_tile_row <= budget:
            best = tr
    return best


def _vmem_limit_bytes(need: int) -> int:
    """Scoped-VMEM limit: actual buffer need + headroom, capped at v7x's 64 MiB."""
    return int(min(_VMEM_CAP_BYTES, max(2 * need, 8 * 1024 * 1024)))


# ---------------------------------------------------------------------------
# Path A: resident W^T (small / moderate H, or H not a multiple of 128)
# ---------------------------------------------------------------------------
def _resident_kernel(x_ref, wt_ref, b_ref, y_ref, hidden_ref, psse_ref,
                     *, valid_rows, tile_rows):
    i = pl.program_id(0)

    # Linear layer: row tile @ W^T on the MXU (f32 accumulation) + bias.
    h = jnp.dot(x_ref[...], wt_ref[...],
                preferred_element_type=jnp.float32) + b_ref[...]
    hidden_ref[...] = h.astype(hidden_ref.dtype)

    # Squared error.  Boundary-tile rows past `valid_rows` read undefined data
    # (block does not divide rows) -> zero them before squaring; their hidden
    # writes are dropped by Pallas automatically.
    d = h - y_ref[...]
    rid = i * tile_rows + jax.lax.broadcasted_iota(jnp.int32, d.shape, 0)
    d = jnp.where(rid < valid_rows, d, 0.0)
    d2 = d * d

    # Fold sublane groups of 8 -> lane-shaped (8, H) partial; the single
    # cross-lane reduce happens once in the wrapper.
    psse_ref[...] = d2.reshape(-1, 8, d2.shape[-1]).sum(axis=0)


def _linear_mse_resident(x2d, y2d, wt, b2d, *, tile_rows, single_buffer_weight):
    rows, H = y2d.shape
    n_tiles = pl.cdiv(rows, tile_rows)
    x_b = x2d.dtype.itemsize
    w_b = wt.dtype.itemsize

    resident_kw = {}
    if single_buffer_weight:
        # Constant block index -> resident block; double-buffering it only
        # doubles VMEM footprint (the big lever on v7x's 64 MiB VMEM).
        resident_kw = dict(pipeline_mode=pl.Buffered(1))

    w_bufs = 1 if single_buffer_weight else 2
    vmem_need = (2 * tile_rows * H * (x_b + 8)          # x,y,hidden tiles x2 buffers
                 + w_bufs * H * H * w_b                 # resident W^T
                 + 2 * 8 * H * 4 + 2 * H * 4)           # psse + bias

    cost = pl.CostEstimate(
        flops=2 * rows * H * H + 6 * rows * H,
        transcendentals=0,
        bytes_accessed=int(rows * H * x_b + rows * H * 4 + rows * H * 4
                           + H * H * w_b + n_tiles * 8 * H * 4 + H * 4),
    )

    kernel = functools.partial(_resident_kernel,
                               valid_rows=rows, tile_rows=tile_rows)
    return pl.pallas_call(
        kernel,
        out_shape=(jax.ShapeDtypeStruct((rows, H), jnp.float32),
                   jax.ShapeDtypeStruct((n_tiles * 8, H), jnp.float32)),
        grid_spec=pltpu.PrefetchScalarGridSpec(
            num_scalar_prefetch=0,
            grid=(n_tiles,),
            in_specs=[
                pl.BlockSpec((tile_rows, H), lambda i: (i, 0)),             # x rows
                pl.BlockSpec((H, H), lambda i: (0, 0), **resident_kw),      # W^T
                pl.BlockSpec((1, H), lambda i: (0, 0), **resident_kw),      # bias
                pl.BlockSpec((tile_rows, H), lambda i: (i, 0)),             # labels
            ],
            out_specs=[
                pl.BlockSpec((tile_rows, H), lambda i: (i, 0)),             # hidden
                pl.BlockSpec((8, H), lambda i: (i, 0)),                     # SSE partial
            ],
        ),
        compiler_params=pltpu.CompilerParams(
            dimension_semantics=("parallel",),        # no cross-tile carry
            vmem_limit_bytes=_vmem_limit_bytes(vmem_need),
        ),
        cost_estimate=cost,
    )(x2d, wt, b2d, y2d)


# ---------------------------------------------------------------------------
# Path B: K/N-tiled matmul for large H (resident W^T would not fit in VMEM)
# ---------------------------------------------------------------------------
def _tiled_kernel(x_ref, wt_ref, b_ref, y_ref, hidden_ref, psse_ref, acc_ref,
                  *, valid_rows, tile_rows):
    i = pl.program_id(0)
    k = pl.program_id(2)

    @pl.when(k == 0)
    def _():
        acc_ref[...] = jnp.zeros_like(acc_ref)

    acc_ref[...] += jnp.dot(x_ref[...], wt_ref[...],
                            preferred_element_type=jnp.float32)

    @pl.when(k == pl.num_programs(2) - 1)
    def _():
        h = acc_ref[...] + b_ref[...]
        hidden_ref[...] = h.astype(hidden_ref.dtype)
        d = h - y_ref[...]
        rid = i * tile_rows + jax.lax.broadcasted_iota(jnp.int32, d.shape, 0)
        d = jnp.where(rid < valid_rows, d, 0.0)
        d2 = d * d
        psse_ref[...] = d2.reshape(-1, 8, d2.shape[-1]).sum(axis=0)


def _linear_mse_tiled(x2d, y2d, wt, b2d, *, tile_rows, tile_n, tile_k):
    rows, H = y2d.shape
    n_row = pl.cdiv(rows, tile_rows)
    n_n = H // tile_n
    n_k = H // tile_k
    x_b = x2d.dtype.itemsize
    w_b = wt.dtype.itemsize

    vmem_need = (2 * tile_rows * tile_k * x_b           # x tiles
                 + 2 * tile_rows * tile_n * 4 * 2       # y + hidden tiles
                 + tile_rows * tile_n * 4               # f32 accumulator
                 + 2 * tile_k * tile_n * w_b            # streamed W^T tiles
                 + 2 * tile_n * 4 + 2 * 8 * tile_n * 4)  # bias + psse

    cost = pl.CostEstimate(
        flops=2 * rows * H * H + 6 * rows * H,
        transcendentals=0,
        bytes_accessed=int(rows * H * x_b * n_n + rows * H * 4 + rows * H * 4
                           + H * H * w_b * n_row + n_row * 8 * H * 4 + H * 4),
    )

    kernel = functools.partial(_tiled_kernel,
                               valid_rows=rows, tile_rows=tile_rows)
    return pl.pallas_call(
        kernel,
        out_shape=(jax.ShapeDtypeStruct((rows, H), jnp.float32),
                   jax.ShapeDtypeStruct((n_row * 8, H), jnp.float32)),
        grid_spec=pltpu.PrefetchScalarGridSpec(
            num_scalar_prefetch=0,
            grid=(n_row, n_n, n_k),
            in_specs=[
                pl.BlockSpec((tile_rows, tile_k), lambda i, j, k: (i, k)),  # x
                pl.BlockSpec((tile_k, tile_n), lambda i, j, k: (k, j)),     # W^T
                pl.BlockSpec((1, tile_n), lambda i, j, k: (0, j)),          # bias
                pl.BlockSpec((tile_rows, tile_n), lambda i, j, k: (i, j)),  # labels
            ],
            out_specs=[
                pl.BlockSpec((tile_rows, tile_n), lambda i, j, k: (i, j)),  # hidden
                pl.BlockSpec((8, tile_n), lambda i, j, k: (i, j)),          # SSE partial
            ],
            scratch_shapes=[pltpu.VMEM((tile_rows, tile_n), jnp.float32)],
        ),
        compiler_params=pltpu.CompilerParams(
            dimension_semantics=("parallel", "parallel", "arbitrary"),
            vmem_limit_bytes=_vmem_limit_bytes(vmem_need),
        ),
        cost_estimate=cost,
    )(x2d, wt, b2d, y2d)


# ---------------------------------------------------------------------------
# Wrapper
# ---------------------------------------------------------------------------
def base_model_forward(input_ids, labels, weight, bias, *,
                       tile_rows=None, tile_n=None, tile_k=None,
                       force_tiled=False, compute_dtype=None):
    """Pallas equivalent of BaseModel.forward.

    input_ids, labels: (B, S, H) float32;  weight: (H, H) torch convention
    (out_features x in_features);  bias: (H,).
    Returns (loss: scalar float32, hidden: (B, S, H) float32).
    """
    B, S, H = input_ids.shape
    rows = B * S

    # Free row-major views — no padded HBM copies of x / labels / hidden.
    x2d = input_ids.reshape(rows, H)
    y2d = labels.reshape(rows, H).astype(jnp.float32)
    wt = weight.T                       # hidden = x @ W^T + b
    b2d = bias.astype(jnp.float32).reshape(1, H)

    if compute_dtype is not None:
        # Optional bf16 MXU feed for the compute-bound large-H regime
        # (accumulation stays f32 via preferred_element_type).
        x2d = x2d.astype(compute_dtype)
        wt = wt.astype(compute_dtype)
    else:
        x2d = x2d.astype(jnp.float32)
        wt = wt.astype(jnp.float32)

    x_b = x2d.dtype.itemsize
    w_b = wt.dtype.itemsize

    # Large H: a resident W^T blows past VMEM (f32 H=4096 -> 64 MiB = all of
    # v7x) -> stream it with K/N tiling instead.
    # TODO(synk): large H that is not a multiple of 128 still uses the
    # resident path (would need K-dim masking in the tiled matmul).
    use_tiled = (force_tiled or H * H * w_b > 16 * 1024 * 1024) and H % 128 == 0

    if use_tiled:
        if tile_n is None:
            tile_n = 512 if H % 512 == 0 else (256 if H % 256 == 0 else 128)
        if tile_k is None:
            tile_k = 512 if H % 512 == 0 else (256 if H % 256 == 0 else 128)
        if tile_rows is None:
            per_row = 2 * tile_k * x_b + 4 * tile_n * 4 + tile_n * 4
            fixed = 2 * tile_k * tile_n * w_b + 2 * tile_n * 4 + 2 * 8 * tile_n * 4
            tile_rows = _pick_tile_rows(rows, per_row, fixed)
        hidden2d, psse = _linear_mse_tiled(
            x2d, y2d, wt, b2d, tile_rows=tile_rows, tile_n=tile_n, tile_k=tile_k)
    else:
        if tile_rows is None:
            per_row = 2 * H * (x_b + 8)
            fixed = H * H * w_b + 2 * H * 4 + 2 * 8 * H * 4
            tile_rows = _pick_tile_rows(rows, per_row, fixed)
        try:
            hidden2d, psse = _linear_mse_resident(
                x2d, y2d, wt, b2d, tile_rows=tile_rows, single_buffer_weight=True)
        except Exception:
            # Fallback for JAX versions where BlockSpec pipeline_mode /
            # pl.Buffered(1) is not supported by the pallas_call pipeline:
            # accept default double-buffering of the resident weight.
            hidden2d, psse = _linear_mse_resident(
                x2d, y2d, wt, b2d, tile_rows=tile_rows, single_buffer_weight=False)

    # Single epilogue reduce + mean over the real element count.
    loss = jnp.sum(psse) / jnp.float32(rows * H)
    hidden = hidden2d.reshape(B, S, H)
    return loss, hidden


if __name__ == "__main__":
    # --- Test 1: module-sized shapes (resident-weight path; H=32 is not a
    # multiple of 128 -> full-extent lane blocks, no padded copies). ---
    B, S, H = 2, 8, 32
    key = jax.random.PRNGKey(0)
    k_x, k_y, k_w, k_b = jax.random.split(key, 4)

    input_ids = jax.random.normal(k_x, (B, S, H), dtype=jnp.float32)
    labels = jax.random.normal(k_y, (B, S, H), dtype=jnp.float32)
    bound = 1.0 / jnp.sqrt(jnp.float32(H))
    weight = jax.random.uniform(k_w, (H, H), jnp.float32, -bound, bound)
    bias = jax.random.uniform(k_b, (H,), jnp.float32, -bound, bound)

    loss, hidden = base_model_forward(input_ids, labels, weight, bias)
    jax.block_until_ready((loss, hidden))

    hidden_ref = input_ids @ weight.T + bias
    loss_ref = jnp.mean((hidden_ref - labels) ** 2)
    assert jnp.allclose(hidden, hidden_ref, atol=1e-5, rtol=1e-5)
    assert jnp.allclose(loss, loss_ref, atol=1e-5, rtol=1e-5)

    # --- Test 2: exercise the large-H K/N-tiled path (forced at a small,
    # fast shape: H=256 tiled as 128x128 blocks -> 2-step K accumulation). ---
    B2, S2, H2 = 2, 8, 256
    k_x2, k_y2, k_w2, k_b2 = jax.random.split(jax.random.PRNGKey(1), 4)
    input_ids2 = jax.random.normal(k_x2, (B2, S2, H2), dtype=jnp.float32)
    labels2 = jax.random.normal(k_y2, (B2, S2, H2), dtype=jnp.float32)
    bound2 = 1.0 / jnp.sqrt(jnp.float32(H2))
    weight2 = jax.random.uniform(k_w2, (H2, H2), jnp.float32, -bound2, bound2)
    bias2 = jax.random.uniform(k_b2, (H2,), jnp.float32, -bound2, bound2)

    loss2, hidden2 = base_model_forward(input_ids2, labels2, weight2, bias2,
                                        force_tiled=True, tile_n=128, tile_k=128)
    jax.block_until_ready((loss2, hidden2))

    hidden2_ref = input_ids2 @ weight2.T + bias2
    loss2_ref = jnp.mean((hidden2_ref - labels2) ** 2)
    assert jnp.allclose(hidden2, hidden2_ref, atol=1e-4, rtol=1e-4)
    assert jnp.allclose(loss2, loss2_ref, atol=1e-5, rtol=1e-5)

    print("KERNEL_OK")
</pallas_src>

<mosaic_0001>
module attributes {stable_mosaic.version = 11 : i64} {
  func.func @_resident_kernel(%arg0: i32, %arg1: memref<16x32xf32, #tpu.memory_space<vmem>>, %arg2: memref<32x32xf32, #tpu.memory_space<vmem>>, %arg3: memref<1x32xf32, #tpu.memory_space<vmem>>, %arg4: memref<16x32xf32, #tpu.memory_space<vmem>>, %arg5: memref<16x32xf32, #tpu.memory_space<vmem>>, %arg6: memref<8x32xf32, #tpu.memory_space<vmem>>) attributes {dimension_semantics = [#tpu.dimension_semantics<parallel>], iteration_bounds = array<i64: 1>, scalar_prefetch = 0 : i64, scratch_operands = 0 : i64, tpu.core_type = #tpu.core_type<tc>, window_params = [{transform_indices = @transform_0, window_bounds = array<i64: 16, 32>}, {pipeline_mode = #tpu.pipeline_mode<synchronous>, transform_indices = @transform_1, window_bounds = array<i64: 32, 32>}, {pipeline_mode = #tpu.pipeline_mode<synchronous>, transform_indices = @transform_2, window_bounds = array<i64: 1, 32>}, {transform_indices = @transform_3, window_bounds = array<i64: 16, 32>}, {transform_indices = @transform_4, window_bounds = array<i64: 16, 32>}, {transform_indices = @transform_5, window_bounds = array<i64: 8, 32>}]} {
    %c0 = arith.constant 0 : index
    %c0_0 = arith.constant 0 : index
    %0 = vector.load %arg1[%c0, %c0_0] : memref<16x32xf32, #tpu.memory_space<vmem>>, vector<16x32xf32>
    %c0_1 = arith.constant 0 : index
    %c0_2 = arith.constant 0 : index
    %1 = vector.load %arg2[%c0_1, %c0_2] : memref<32x32xf32, #tpu.memory_space<vmem>>, vector<32x32xf32>
    %cst = arith.constant dense<0.000000e+00> : vector<16x32xf32>
    %2 = tpu.matmul %0, %1, %cst {dimension_numbers = #tpu.dot_dimension_numbers<[1], [0], [0], [1], [0, 0, 1, 1], [], []>} : vector<16x32xf32>, vector<32x32xf32>, vector<16x32xf32> -> vector<16x32xf32>
    %c0_3 = arith.constant 0 : index
    %c0_4 = arith.constant 0 : index
    %3 = vector.load %arg3[%c0_3, %c0_4] : memref<1x32xf32, #tpu.memory_space<vmem>>, vector<1x32xf32>
    %4 = vector.broadcast %3 : vector<1x32xf32> to vector<16x32xf32>
    %5 = arith.addf %2, %4 : vector<16x32xf32>
    %c0_5 = arith.constant 0 : index
    %c0_6 = arith.constant 0 : index
    %6 = vector.load %arg5[%c0_5, %c0_6] : memref<16x32xf32, #tpu.memory_space<vmem>>, vector<16x32xf32>
    tpu.vector_store %arg5[%c0_5, %c0_6], %5 {strides = array<i32>} : memref<16x32xf32, #tpu.memory_space<vmem>>, vector<16x32xf32>,
    %c0_7 = arith.constant 0 : index
    %c0_8 = arith.constant 0 : index
    %7 = vector.load %arg4[%c0_7, %c0_8] : memref<16x32xf32, #tpu.memory_space<vmem>>, vector<16x32xf32>
    %8 = arith.subf %5, %7 : vector<16x32xf32>
    %c16_i32 = arith.constant 16 : i32
    %9 = arith.muli %arg0, %c16_i32 : i32
    %10 = tpu.iota {dimensions = array<i32: 0>} : vector<16x32xi32>
    %11 = vector.broadcast %9 : i32 to vector<16x32xi32>
    %12 = arith.addi %11, %10 : vector<16x32xi32>
    %c16_i32_9 = arith.constant 16 : i32
    %13 = vector.broadcast %c16_i32_9 : i32 to vector<16x32xi32>
    %14 = arith.cmpi slt, %12, %13 : vector<16x32xi32>
    %cst_10 = arith.constant 0.000000e+00 : f32
    %15 = vector.broadcast %cst_10 : f32 to vector<16x32xf32>
    %16 = arith.select %14, %8, %15 : vector<16x32xi1>, vector<16x32xf32>
    %17 = arith.mulf %16, %16 : vector<16x32xf32>
    %18 = vector.shape_cast %17 : vector<16x32xf32> to vector<2x8x32xf32>
    %cst_11 = arith.constant dense<0.000000e+00> : vector<8x32xf32>
    %19 = vector.multi_reduction <add>, %18, %cst_11 [0] : vector<2x8x32xf32> to vector<8x32xf32>
    %c0_12 = arith.constant 0 : index
    %c0_13 = arith.constant 0 : index
    %20 = vector.load %arg6[%c0_12, %c0_13] : memref<8x32xf32, #tpu.memory_space<vmem>>, vector<8x32xf32>
    tpu.vector_store %arg6[%c0_12, %c0_13], %19 {strides = array<i32>} : memref<8x32xf32, #tpu.memory_space<vmem>>, vector<8x32xf32>,
    return
  }
  func.func @transform_0(%arg0: i32) -> (i32, i32) {
    %c0_i32 = arith.constant 0 : i32
    %c0_i32_0 = arith.constant 0 : i32
    return %arg0, %c0_i32 : i32, i32
  }
  func.func @transform_1(%arg0: i32) -> (i32, i32) {
    %c0_i32 = arith.constant 0 : i32
    %c0_i32_0 = arith.constant 0 : i32
    %c0_i32_1 = arith.constant 0 : i32
    return %c0_i32, %c0_i32_0 : i32, i32
  }
  func.func @transform_2(%arg0: i32) -> (i32, i32) {
    %c0_i32 = arith.constant 0 : i32
    %c0_i32_0 = arith.constant 0 : i32
    %c0_i32_1 = arith.constant 0 : i32
    return %c0_i32, %c0_i32_0 : i32, i32
  }
  func.func @transform_3(%arg0: i32) -> (i32, i32) {
    %c0_i32 = arith.constant 0 : i32
    %c0_i32_0 = arith.constant 0 : i32
    return %arg0, %c0_i32 : i32, i32
  }
  func.func @transform_4(%arg0: i32) -> (i32, i32) {
    %c0_i32 = arith.constant 0 : i32
    %c0_i32_0 = arith.constant 0 : i32
    return %arg0, %c0_i32 : i32, i32
  }
  func.func @transform_5(%arg0: i32) -> (i32, i32) {
    %c0_i32 = arith.constant 0 : i32
    %c0_i32_0 = arith.constant 0 : i32
    return %arg0, %c0_i32 : i32, i32
  }
}

module attributes {stable_mosaic.version = 11 : i64} {
  func.func @_resident_kernel(%arg0: i32, %arg1: memref<16x32xf32, #tpu.memory_space<vmem>>, %arg2: memref<32x32xf32, #tpu.memory_space<vmem>>, %arg3: memref<1x32xf32, #tpu.memory_space<vmem>>, %arg4: memref<16x32xf32, #tpu.memory_space<vmem>>, %arg5: memref<16x32xf32, #tpu.memory_space<vmem>>, %arg6: memref<8x32xf32, #tpu.memory_space<vmem>>) attributes {dimension_semantics = [#tpu.dimension_semantics<parallel>], iteration_bounds = array<i64: 1>, scalar_prefetch = 0 : i64, scratch_operands = 0 : i64, tpu.core_type = #tpu.core_type<tc>, window_params = [{transform_indices = @transform_0, window_bounds = array<i64: 16, 32>}, {pipeline_mode = #tpu.pipeline_mode<synchronous>, transform_indices = @transform_1, window_bounds = array<i64: 32, 32>}, {pipeline_mode = #tpu.pipeline_mode<synchronous>, transform_indices = @transform_2, window_bounds = array<i64: 1, 32>}, {transform_indices = @transform_3, window_bounds = array<i64: 16, 32>}, {transform_indices = @transform_4, window_bounds = array<i64: 16, 32>}, {transform_indices = @transform_5, window_bounds = array<i64: 8, 32>}]} {
    %c0 = arith.constant 0 : index
    %c0_0 = arith.constant 0 : index
    %0 = vector.load %arg1[%c0, %c0_0] : memref<16x32xf32, #tpu.memory_space<vmem>>, vector<16x32xf32>
    %c0_1 = arith.constant 0 : index
    %c0_2 = arith.constant 0 : index
    %1 = vector.load %arg2[%c0_1, %c0_2] : memref<32x32xf32, #tpu.memory_space<vmem>>, vector<32x32xf32>
    %cst = arith.constant dense<0.000000e+00> : vector<16x32xf32>
    %2 = tpu.matmul %0, %1, %cst {dimension_numbers = #tpu.dot_dimension_numbers<[1], [0], [0], [1], [0, 0, 1, 1], [], []>} : vector<16x32xf32>, vector<32x32xf32>, vector<16x32xf32> -> vector<16x32xf32>
    %c0_3 = arith.constant 0 : index
    %c0_4 = arith.constant 0 : index
    %3 = vector.load %arg3[%c0_3, %c0_4] : memref<1x32xf32, #tpu.memory_space<vmem>>, vector<1x32xf32>
    %4 = vector.broadcast %3 : vector<1x32xf32> to vector<16x32xf32>
    %5 = arith.addf %2, %4 : vector<16x32xf32>
    %c0_5 = arith.constant 0 : index
    %c0_6 = arith.constant 0 : index
    %6 = vector.load %arg5[%c0_5, %c0_6] : memref<16x32xf32, #tpu.memory_space<vmem>>, vector<16x32xf32>
    tpu.vector_store %arg5[%c0_5, %c0_6], %5 {strides = array<i32>} : memref<16x32xf32, #tpu.memory_space<vmem>>, vector<16x32xf32>,
    %c0_7 = arith.constant 0 : index
    %c0_8 = arith.constant 0 : index
    %7 = vector.load %arg4[%c0_7, %c0_8] : memref<16x32xf32, #tpu.memory_space<vmem>>, vector<16x32xf32>
    %8 = arith.subf %5, %7 : vector<16x32xf32>
    %c16_i32 = arith.constant 16 : i32
    %9 = arith.muli %arg0, %c16_i32 : i32
    %10 = tpu.iota {dimensions = array<i32: 0>} : vector<16x32xi32>
    %11 = vector.broadcast %9 : i32 to vector<16x32xi32>
    %12 = arith.addi %11, %10 : vector<16x32xi32>
    %c16_i32_9 = arith.constant 16 : i32
    %13 = vector.broadcast %c16_i32_9 : i32 to vector<16x32xi32>
    %14 = arith.cmpi slt, %12, %13 : vector<16x32xi32>
    %cst_10 = arith.constant 0.000000e+00 : f32
    %15 = vector.broadcast %cst_10 : f32 to vector<16x32xf32>
    %16 = arith.select %14, %8, %15 : vector<16x32xi1>, vector<16x32xf32>
    %17 = arith.mulf %16, %16 : vector<16x32xf32>
    %18 = vector.shape_cast %17 : vector<16x32xf32> to vector<2x8x32xf32>
    %cst_11 = arith.constant dense<0.000000e+00> : vector<8x32xf32>
    %19 = vector.multi_reduction <add>, %18, %cst_11 [0] : vector<2x8x32xf32> to vector<8x32xf32>
    %c0_12 = arith.constant 0 : index
    %c0_13 = arith.constant 0 : index
    %20 = vector.load %arg6[%c0_12, %c0_13] : memref<8x32xf32, #tpu.memory_space<vmem>>, vector<8x32xf32>
    tpu.vector_store %arg6[%c0_12, %c0_13], %19 {strides = array<i32>} : memref<8x32xf32, #tpu.memory_space<vmem>>, vector<8x32xf32>,
    return
  }
  func.func @transform_0(%arg0: i32) -> (i32, i32) {
    %c0_i32 = arith.constant 0 : i32
    %c0_i32_0 = arith.constant 0 : i32
    return %arg0, %c0_i32 : i32, i32
  }
  func.func @transform_1(%arg0: i32) -> (i32, i32) {
    %c0_i32 = arith.constant 0 : i32
    %c0_i32_0 = arith.constant 0 : i32
    %c0_i32_1 = arith.constant 0 : i32
    return %c0_i32, %c0_i32_0 : i32, i32
  }
  func.func @transform_2(%arg0: i32) -> (i32, i32) {
    %c0_i32 = arith.constant 0 : i32
    %c0_i32_0 = arith.constant 0 : i32
    %c0_i32_1 = arith.constant 0 : i32
    return %c0_i32, %c0_i32_0 : i32, i32
  }
  func.func @transform_3(%arg0: i32) -> (i32, i32) {
    %c0_i32 = arith.constant 0 : i32
    %c0_i32_0 = arith.constant 0 : i32
    return %arg0, %c0_i32 : i32, i32
  }
  func.func @transform_4(%arg0: i32) -> (i32, i32) {
    %c0_i32 = arith.constant 0 : i32
    %c0_i32_0 = arith.constant 0 : i32
    return %arg0, %c0_i32 : i32, i32
  }
  func.func @transform_5(%arg0: i32) -> (i32, i32) {
    %c0_i32 = arith.constant 0 : i32
    %c0_i32_0 = arith.constant 0 : i32
    return %arg0, %c0_i32 : i32, i32
  }
}

</mosaic_0001>

<llo_original>
// kernel: tpu_custom_call.1
$region0: #{tpu_custom_call.1}
  #allocation0 [shape = 'u32[]', space=smem, size = 0x4, offset = 0x4, fixed_abs, tag = 'smem constant byte address 0x4 - core index']
  #allocation1 [shape = 'u32[144,128]{1,0:T(1,128)}', space=vmem, size = 0x12000, scoped, tag = 'internal scratch']
  %s0 = inlined_call_operand.hbm [shape: f32[16,32], index: 0, kind: input, shape index: {}]
  %s1 = inlined_call_operand.hbm [shape: f32[32,32], index: 1, kind: input, shape index: {}]
  %s2 = inlined_call_operand.vmem [shape: f32[1,32], index: 2, kind: input, shape index: {}]
  %s3 = inlined_call_operand.hbm [shape: f32[16,32], index: 3, kind: input, shape index: {}]
  %s4 = inlined_call_operand.hbm [shape: f32[16,32], index: 4, kind: output, shape index: {0}]
  %s5 = inlined_call_operand.hbm [shape: f32[8,32], index: 5, kind: output, shape index: {1}]
  %6 = xla_tuple %s4, %s5
  %s7 = sld [smem:[#allocation0]]
  $region46: #{tpu_custom_call.1} parent=0
    _
  %s9 = ssub.s32 1, %s7
  %s10 = scalar_select 0, %s9, %s7
  $region1: #{tpu_custom_call.1} parent=0
    #allocation2 [shape = 'u8[8192]{0}', space=vmem, size = 0x2000, scoped, tag = 'input window, operand 0, single buffered']
    #allocation3 [shape = 's32[1]{0}', space=sflag, size = 0x4, scoped, tag = 'scoped memory for tpu_custom_call.1']
    #allocation4 [shape = 's32[1]{0}', space=sflag, size = 0x4, scoped, tag = 'scoped memory for tpu_custom_call.1']
    #allocation5 [shape = 'u8[16384]{0}', space=vmem, size = 0x4000, scoped, tag = 'input window, operand 1, single buffered']
    #allocation6 [shape = 's32[1]{0}', space=sflag, size = 0x4, scoped, tag = 'scoped memory for tpu_custom_call.1']
    #allocation7 [shape = 'u8[8192]{0}', space=vmem, size = 0x2000, scoped, tag = 'input window, operand 3, single buffered']
    #allocation8 [shape = 'u8[8192]{0}', space=vmem, size = 0x2000, scoped, tag = 'output window, operand 0, single buffered']
    #allocation9 [shape = 'u8[4096]{0}', space=vmem, size = 0x1000, scoped, tag = 'output window, operand 1, single buffered']
    #allocation10 [shape = 's32[1]{0}', space=sflag, size = 0x4, scoped, tag = 'scoped memory for tpu_custom_call.1']
    %11 = vsyncpa [#allocation3], 0
    %12 = vsyncpa [#allocation6], 0
    %13 = vsyncpa [#allocation4], 0
    %14 = vsyncpa [#allocation10], 0
    // Predicated region
    $region2: #{tpu_custom_call.1} parent=1 // pred_check
      _
    $region3: #{tpu_custom_call.1} parent=1 // pred_check_branch
      %16 = sbr.rel (0) target = $region5
    $region4: #{tpu_custom_call.1} parent=1 // pred_region
      %s18 = ssub.s32 256, 256
      %19 = vsyncadd [#allocation3], %s18
      %s20 = sshll.u32 [#allocation2], 4
      %s21 = int_to_ptr.vmem [resolvable:$true] %s20
      %26 = dma.hbm_to_vmem [thread:$0]  %s0, 256, %s21, [#allocation3], 128, 128, 8
    $region5: #{tpu_custom_call.1} parent=1 // pred_fallthru
      _
    // Predicated region
    $region6: #{tpu_custom_call.1} parent=1 // pred_check
      _
    $region7: #{tpu_custom_call.1} parent=1 // pred_check_branch
      %28 = sbr.rel (0) target = $region9
    $region8: #{tpu_custom_call.1} parent=1 // pred_region
      %s30 = ssub.s32 512, 512
      %31 = vsyncadd [#allocation6], %s30
      %s32 = sshll.u32 [#allocation5], 4
      %s33 = int_to_ptr.vmem [resolvable:$true] %s32
      %38 = dma.hbm_to_vmem [thread:$0]  %s1, 512, %s33, [#allocation6], 128, 128, 8
    $region9: #{tpu_custom_call.1} parent=1 // pred_fallthru
      _
    // Predicated region
    $region10: #{tpu_custom_call.1} parent=1 // pred_check
      _
    $region11: #{tpu_custom_call.1} parent=1 // pred_check_branch
      %40 = sbr.rel (0) target = $region13
    $region12: #{tpu_custom_call.1} parent=1 // pred_region
      _
    $region13: #{tpu_custom_call.1} parent=1 // pred_fallthru
      _
    // Predicated region
    $region14: #{tpu_custom_call.1} parent=1 // pred_check
      _
    $region15: #{tpu_custom_call.1} parent=1 // pred_check_branch
      %42 = sbr.rel (0) target = $region17
    $region16: #{tpu_custom_call.1} parent=1 // pred_region
      %s44 = ssub.s32 256, 256
      %45 = vsyncadd [#allocation6], %s44
      %s46 = sshll.u32 [#allocation7], 4
      %s47 = int_to_ptr.vmem [resolvable:$true] %s46
      %52 = dma.hbm_to_vmem [thread:$0]  %s3, 256, %s47, [#allocation6], 128, 128, 8
    $region17: #{tpu_custom_call.1} parent=1 // pred_fallthru
      _
    // Predicated region
    $region18: #{tpu_custom_call.1} parent=1 // pred_check
      _
    $region19: #{tpu_custom_call.1} parent=1 // pred_check_branch
      %54 = sbr.rel (0) target = $region21
    $region20: #{tpu_custom_call.1} parent=1 // pred_region
      %55 = dma.done [#allocation3], 256
    $region21: #{tpu_custom_call.1} parent=1 // pred_fallthru
      _
    // Predicated region
    $region22: #{tpu_custom_call.1} parent=1 // pred_check
      _
    $region23: #{tpu_custom_call.1} parent=1 // pred_check_branch
      %57 = sbr.rel (0) target = $region25
    $region24: #{tpu_custom_call.1} parent=1 // pred_region
      %58 = dma.done [#allocation6], 512
    $region25: #{tpu_custom_call.1} parent=1 // pred_fallthru
      _
    // Predicated region
    $region26: #{tpu_custom_call.1} parent=1 // pred_check
      _
    $region27: #{tpu_custom_call.1} parent=1 // pred_check_branch
      %60 = sbr.rel (0) target = $region29
    $region28: #{tpu_custom_call.1} parent=1 // pred_region
      %61 = dma.done [#allocation6], 256
    $region29: #{tpu_custom_call.1} parent=1 // pred_fallthru
      _
    %v62 = vld [vmem:[#allocation2] sm:$0xff]
    %v63 = vld [vmem:[#allocation2 + $0x8] sm:$0xff]
    %v64 = vld [vmem:[#allocation5] sm:$0xff]
    %v65 = vld [vmem:[#allocation5 + $0x8] sm:$0xff]
    %v66 = vld [vmem:[#allocation5 + $0x10] sm:$0xff]
    %v67 = vld [vmem:[#allocation5 + $0x18] sm:$0xff]
    %v68 = vld [vmem:[%s2] sm:$0x1]
    %v70 = vlaneseq
    %v71 = vshrl.u32 %v70, 7
    %v72 = vsub.s32 0, %v71
    %v73 = vrot.slane %v68, %v72
    %vm75 = vcmask 261120
    %v77 = vsel %vm75, %v62, 0
    %v80 = vsel %vm75, %v63, 0
    %82 = vmatprep.subr.mxu0 0.0
    %83 = vmatpush1.msra.mxu0 %v64
    %84 = vmatprep.subr.mxu0 0.0
    %85 = vmatpush1.msra.mxu0 %v65
    %86 = vmatprep.subr.mxu0 0.0
    %87 = vmatpush1.msra.mxu0 %v66
    %88 = vmatprep.subr.mxu0 0.0
    %89 = vmatpush1.msra.mxu0 %v67
    %90 = vmatprep.subr.mxu0 0.0
    %91 = vmatpush1.msra.mxu0 0.0
    %92 = vmatprep.subr.mxu0 0.0
    %93 = vmatpush1.msra.mxu0 0.0
    %94 = vmatprep.subr.mxu0 0.0
    %95 = vmatpush1.msra.mxu0 0.0
    %96 = vmatprep.subr.mxu0 0.0
    %97 = vmatpush1.msra.mxu0 0.0
    %98 = vmatprep.subr.mxu0 0.0
    %99 = vmatpush1.msra.mxu0 0.0
    %100 = vmatprep.subr.mxu0 0.0
    %101 = vmatpush1.msra.mxu0 0.0
    %102 = vmatprep.subr.mxu0 0.0
    %103 = vmatpush1.msra.mxu0 0.0
    %104 = vmatprep.subr.mxu0 0.0
    %105 = vmatpush1.msra.mxu0 0.0
    %106 = vmatprep.subr.mxu0 0.0
    %107 = vmatpush1.msra.mxu0 0.0
    %108 = vmatprep.subr.mxu0 0.0
    %109 = vmatpush1.msra.mxu0 0.0
    %110 = vmatprep.subr.mxu0 0.0
    %111 = vmatpush1.msra.mxu0 0.0
    %112 = vmatprep.subr.mxu0 0.0
    %113 = vmatpush1.msra.mxu0 0.0
    %114 = vmatprep.subr.mxu0 0.0
    %115 = vmatpush1.msra.mxu0 0.0
    %116 = vmatprep.subr.mxu0 0.0
    %117 = vmatpush1.msra.mxu0 0.0
    %118 = vmatprep.subr.mxu0 0.0
    %119 = vmatpush1.msra.mxu0 0.0
    %120 = vmatprep.subr.mxu0 0.0
    %121 = vmatpush1.msra.mxu0 0.0
    %122 = vmatprep.subr.mxu0 0.0
    %123 = vmatpush1.msra.mxu0 0.0
    %124 = vmatprep.subr.mxu0 0.0
    %125 = vmatpush1.msra.mxu0 0.0
    %126 = vmatprep.subr.mxu0 0.0
    %127 = vmatpush1.msra.mxu0 0.0
    %128 = vmatprep.subr.mxu0 0.0
    %129 = vmatpush1.msra.mxu0 0.0
    %130 = vmatprep.subr.mxu0 0.0
    %131 = vmatpush1.msra.mxu0 0.0
    %132 = vmatprep.subr.mxu0 0.0
    %133 = vmatpush1.msra.mxu0 0.0
    %134 = vmatprep.subr.mxu0 0.0
    %135 = vmatpush1.msra.mxu0 0.0
    %136 = vmatprep.subr.mxu0 0.0
    %137 = vmatpush1.msra.mxu0 0.0
    %138 = vmatprep.subr.mxu0 0.0
    %139 = vmatpush1.msra.mxu0 0.0
    %140 = vmatprep.subr.mxu0 0.0
    %141 = vmatpush1.msra.mxu0 0.0
    %142 = vmatprep.subr.mxu0 0.0
    %143 = vmatpush1.msra.mxu0 0.0
    %144 = vmatprep.subr.mxu0 0.0
    %145 = vmatpush1.msra.mxu0 0.0
    %146 = vmatprep.mubr.f32.mxu0 0.0
    %147 = vmatmul.mubr.f32.gmra.mrb[0].mxu0 %v77
    %v148 = vpop.f32.mrb[0].mxu0
    %v149 = vadd.f32 %v73, %v148
    %v150 = vpop.f32.mrb[0].mxu0
    %151 = vmatprep.mubr.f32.mxu0 0.0
    %152 = vmatmul.mubr.f32.gmra.mrb[0].mxu0 %v80
    %v153 = vpop.f32.mrb[0].mxu0
    %v154 = vadd.f32 %v73, %v153
    %v155 = vpop.f32.mrb[0].mxu0
    %156 = vdwg.mxu0
    %157 = vst.msk [vmem:[#allocation8] sm:$0xff] %vm75, %v149
    %158 = vst.msk [vmem:[#allocation8 + $0x8] sm:$0xff] %vm75, %v154
    %v159 = vld [vmem:[#allocation7] sm:$0xff]
    %v160 = vld [vmem:[#allocation7 + $0x8] sm:$0xff]
    %v161 = vsub.f32 %v149, %v159
    %v162 = vsub.f32 %v154, %v160
    %s163 = smul.u32 0, 16
    %v164 = vlaneseq
    %v165 = vshrl.u32 %v164, 7
    %v166 = vadd.s32 %v165, 8
    %v167 = vstv %s163
    %v168 = vadd.s32 %v167, %v165
    %v169 = vadd.s32 %v167, %v166
    %vm170 = vcmp.lt.s32.totalorder %v168, 16
    %vm171 = vcmp.lt.s32.totalorder %v169, 16
    %v172 = vsel %vm170, %v161, 0.0
    %v173 = vsel %vm171, %v162, 0.0
    %v174 = vmul.f32 %v172, %v172
    %v175 = vmul.f32 %v173, %v173
    %v176 = vsel %vm75, %v174, 0.0
    %v177 = vsel %vm75, %v175, 0.0
    %v178 = vadd.f32 %v176, %v177
    %179 = vst.msk [vmem:[#allocation9] sm:$0xff] %vm75, %v178
    // Predicated region
    $region30: #{tpu_custom_call.1} parent=1 // pred_check
      _
    $region31: #{tpu_custom_call.1} parent=1 // pred_check_branch
      %181 = sbr.rel (0) target = $region33
    $region32: #{tpu_custom_call.1} parent=1 // pred_region
      %s183 = ssub.s32 256, 256
      %184 = vsyncadd [#allocation4], %s183
      %s185 = sshll.u32 [#allocation8], 4
      %s186 = int_to_ptr.vmem [resolvable:$true] %s185
      %191 = dma.vmem_to_hbm [thread:$0]  %s186, 256, %s4, [#allocation4], 128, 128, 8
    $region33: #{tpu_custom_call.1} parent=1 // pred_fallthru
      _
    // Predicated region
    $region34: #{tpu_custom_call.1} parent=1 // pred_check
      _
    $region35: #{tpu_custom_call.1} parent=1 // pred_check_branch
      %193 = sbr.rel (0) target = $region37
    $region36: #{tpu_custom_call.1} parent=1 // pred_region
      %s195 = ssub.s32 128, 128
      %196 = vsyncadd [#allocation10], %s195
      %s198 = sshll.u32 [#allocation9], 4
      %s199 = int_to_ptr.vmem [resolvable:$true] %s198
      %201 = dma.vmem_to_hbm [thread:$0]  %s199, 128, %s5, [#allocation10]
    $region37: #{tpu_custom_call.1} parent=1 // pred_fallthru
      _
    // Predicated region
    $region38: #{tpu_custom_call.1} parent=1 // pred_check
      _
    $region39: #{tpu_custom_call.1} parent=1 // pred_check_branch
      %203 = sbr.rel (0) target = $region41
    $region40: #{tpu_custom_call.1} parent=1 // pred_region
      %204 = dma.done [#allocation4], 256
    $region41: #{tpu_custom_call.1} parent=1 // pred_fallthru
      _
    // Predicated region
    $region42: #{tpu_custom_call.1} parent=1 // pred_check
      _
    $region43: #{tpu_custom_call.1} parent=1 // pred_check_branch
      %206 = sbr.rel (0) target = $region45
    $region44: #{tpu_custom_call.1} parent=1 // pred_region
      %207 = dma.done [#allocation10], 128
    $region45: #{tpu_custom_call.1} parent=1 // pred_fallthru
      _
    %208 = vsyncpa [#allocation3], 1
    %209 = vsyncpa [#allocation6], 1
    %210 = vsyncpa [#allocation4], 1
    %211 = vsyncpa [#allocation10], 1

// kernel: tpu_custom_call.1
$region0: #{tpu_custom_call.1}
  #allocation0 [shape = 'u32[]', space=smem, size = 0x4, offset = 0x4, fixed_abs, tag = 'smem constant byte address 0x4 - core index']
  #allocation1 [shape = 'u32[144,128]{1,0:T(1,128)}', space=vmem, size = 0x12000, scoped, tag = 'internal scratch']
  %s0 = inlined_call_operand.hbm [shape: f32[16,32], index: 0, kind: input, shape index: {}]
  %s1 = inlined_call_operand.hbm [shape: f32[32,32], index: 1, kind: input, shape index: {}]
  %s2 = inlined_call_operand.vmem [shape: f32[1,32], index: 2, kind: input, shape index: {}]
  %s3 = inlined_call_operand.hbm [shape: f32[16,32], index: 3, kind: input, shape index: {}]
  %s4 = inlined_call_operand.hbm [shape: f32[16,32], index: 4, kind: output, shape index: {0}]
  %s5 = inlined_call_operand.hbm [shape: f32[8,32], index: 5, kind: output, shape index: {1}]
  %6 = xla_tuple %s4, %s5
  %s7 = sld [smem:[#allocation0]]
  $region46: #{tpu_custom_call.1} parent=0
    _
  %s9 = ssub.s32 1, %s7
  %s10 = scalar_select 0, %s9, %s7
  $region1: #{tpu_custom_call.1} parent=0
    #allocation2 [shape = 'u8[8192]{0}', space=vmem, size = 0x2000, scoped, tag = 'input window, operand 0, single buffered']
    #allocation3 [shape = 's32[1]{0}', space=sflag, size = 0x4, scoped, tag = 'scoped memory for tpu_custom_call.1']
    #allocation4 [shape = 's32[1]{0}', space=sflag, size = 0x4, scoped, tag = 'scoped memory for tpu_custom_call.1']
    #allocation5 [shape = 'u8[16384]{0}', space=vmem, size = 0x4000, scoped, tag = 'input window, operand 1, single buffered']
    #allocation6 [shape = 's32[1]{0}', space=sflag, size = 0x4, scoped, tag = 'scoped memory for tpu_custom_call.1']
    #allocation7 [shape = 'u8[8192]{0}', space=vmem, size = 0x2000, scoped, tag = 'input window, operand 3, single buffered']
    #allocation8 [shape = 'u8[8192]{0}', space=vmem, size = 0x2000, scoped, tag = 'output window, operand 0, single buffered']
    #allocation9 [shape = 'u8[4096]{0}', space=vmem, size = 0x1000, scoped, tag = 'output window, operand 1, single buffered']
    #allocation10 [shape = 's32[1]{0}', space=sflag, size = 0x4, scoped, tag = 'scoped memory for tpu_custom_call.1']
    %11 = vsyncpa [#allocation3], 0
    %12 = vsyncpa [#allocation6], 0
    %13 = vsyncpa [#allocation4], 0
    %14 = vsyncpa [#allocation10], 0
    // Predicated region
    $region2: #{tpu_custom_call.1} parent=1 // pred_check
      _
    $region3: #{tpu_custom_call.1} parent=1 // pred_check_branch
      %16 = sbr.rel (0) target = $region5
    $region4: #{tpu_custom_call.1} parent=1 // pred_region
      %s18 = ssub.s32 256, 256
      %19 = vsyncadd [#allocation3], %s18
      %s20 = sshll.u32 [#allocation2], 4
      %s21 = int_to_ptr.vmem [resolvable:$true] %s20
      %26 = dma.hbm_to_vmem [thread:$0]  %s0, 256, %s21, [#allocation3], 128, 128, 8
    $region5: #{tpu_custom_call.1} parent=1 // pred_fallthru
      _
    // Predicated region
    $region6: #{tpu_custom_call.1} parent=1 // pred_check
      _
    $region7: #{tpu_custom_call.1} parent=1 // pred_check_branch
      %28 = sbr.rel (0) target = $region9
    $region8: #{tpu_custom_call.1} parent=1 // pred_region
      %s30 = ssub.s32 512, 512
      %31 = vsyncadd [#allocation6], %s30
      %s32 = sshll.u32 [#allocation5], 4
      %s33 = int_to_ptr.vmem [resolvable:$true] %s32
      %38 = dma.hbm_to_vmem [thread:$0]  %s1, 512, %s33, [#allocation6], 128, 128, 8
    $region9: #{tpu_custom_call.1} parent=1 // pred_fallthru
      _
    // Predicated region
    $region10: #{tpu_custom_call.1} parent=1 // pred_check
      _
    $region11: #{tpu_custom_call.1} parent=1 // pred_check_branch
      %40 = sbr.rel (0) target = $region13
    $region12: #{tpu_custom_call.1} parent=1 // pred_region
      _
    $region13: #{tpu_custom_call.1} parent=1 // pred_fallthru
      _
    // Predicated region
    $region14: #{tpu_custom_call.1} parent=1 // pred_check
      _
    $region15: #{tpu_custom_call.1} parent=1 // pred_check_branch
      %42 = sbr.rel (0) target = $region17
    $region16: #{tpu_custom_call.1} parent=1 // pred_region
      %s44 = ssub.s32 256, 256
      %45 = vsyncadd [#allocation6], %s44
      %s46 = sshll.u32 [#allocation7], 4
      %s47 = int_to_ptr.vmem [resolvable:$true] %s46
      %52 = dma.hbm_to_vmem [thread:$0]  %s3, 256, %s47, [#allocation6], 128, 128, 8
    $region17: #{tpu_custom_call.1} parent=1 // pred_fallthru
      _
    // Predicated region
    $region18: #{tpu_custom_call.1} parent=1 // pred_check
      _
    $region19: #{tpu_custom_call.1} parent=1 // pred_check_branch
      %54 = sbr.rel (0) target = $region21
    $region20: #{tpu_custom_call.1} parent=1 // pred_region
      %55 = dma.done [#allocation3], 256
    $region21: #{tpu_custom_call.1} parent=1 // pred_fallthru
      _
    // Predicated region
    $region22: #{tpu_custom_call.1} parent=1 // pred_check
      _
    $region23: #{tpu_custom_call.1} parent=1 // pred_check_branch
      %57 = sbr.rel (0) target = $region25
    $region24: #{tpu_custom_call.1} parent=1 // pred_region
      %58 = dma.done [#allocation6], 512
    $region25: #{tpu_custom_call.1} parent=1 // pred_fallthru
      _
    // Predicated region
    $region26: #{tpu_custom_call.1} parent=1 // pred_check
      _
    $region27: #{tpu_custom_call.1} parent=1 // pred_check_branch
      %60 = sbr.rel (0) target = $region29
    $region28: #{tpu_custom_call.1} parent=1 // pred_region
      %61 = dma.done [#allocation6], 256
    $region29: #{tpu_custom_call.1} parent=1 // pred_fallthru
      _
    %v62 = vld [vmem:[#allocation2] sm:$0xff]
    %v63 = vld [vmem:[#allocation2 + $0x8] sm:$0xff]
    %v64 = vld [vmem:[#allocation5] sm:$0xff]
    %v65 = vld [vmem:[#allocation5 + $0x8] sm:$0xff]
    %v66 = vld [vmem:[#allocation5 + $0x10] sm:$0xff]
    %v67 = vld [vmem:[#allocation5 + $0x18] sm:$0xff]
    %v68 = vld [vmem:[%s2] sm:$0x1]
    %v70 = vlaneseq
    %v71 = vshrl.u32 %v70, 7
    %v72 = vsub.s32 0, %v71
    %v73 = vrot.slane %v68, %v72
    %vm75 = vcmask 261120
    %v77 = vsel %vm75, %v62, 0
    %v80 = vsel %vm75, %v63, 0
    %82 = vmatprep.subr.mxu0 0.0
    %83 = vmatpush1.msra.mxu0 %v64
    %84 = vmatprep.subr.mxu0 0.0
    %85 = vmatpush1.msra.mxu0 %v65
    %86 = vmatprep.subr.mxu0 0.0
    %87 = vmatpush1.msra.mxu0 %v66
    %88 = vmatprep.subr.mxu0 0.0
    %89 = vmatpush1.msra.mxu0 %v67
    %90 = vmatprep.subr.mxu0 0.0
    %91 = vmatpush1.msra.mxu0 0.0
    %92 = vmatprep.subr.mxu0 0.0
    %93 = vmatpush1.msra.mxu0 0.0
    %94 = vmatprep.subr.mxu0 0.0
    %95 = vmatpush1.msra.mxu0 0.0
    %96 = vmatprep.subr.mxu0 0.0
    %97 = vmatpush1.msra.mxu0 0.0
    %98 = vmatprep.subr.mxu0 0.0
    %99 = vmatpush1.msra.mxu0 0.0
    %100 = vmatprep.subr.mxu0 0.0
    %101 = vmatpush1.msra.mxu0 0.0
    %102 = vmatprep.subr.mxu0 0.0
    %103 = vmatpush1.msra.mxu0 0.0
    %104 = vmatprep.subr.mxu0 0.0
    %105 = vmatpush1.msra.mxu0 0.0
    %106 = vmatprep.subr.mxu0 0.0
    %107 = vmatpush1.msra.mxu0 0.0
    %108 = vmatprep.subr.mxu0 0.0
    %109 = vmatpush1.msra.mxu0 0.0
    %110 = vmatprep.subr.mxu0 0.0
    %111 = vmatpush1.msra.mxu0 0.0
    %112 = vmatprep.subr.mxu0 0.0
    %113 = vmatpush1.msra.mxu0 0.0
    %114 = vmatprep.subr.mxu0 0.0
    %115 = vmatpush1.msra.mxu0 0.0
    %116 = vmatprep.subr.mxu0 0.0
    %117 = vmatpush1.msra.mxu0 0.0
    %118 = vmatprep.subr.mxu0 0.0
    %119 = vmatpush1.msra.mxu0 0.0
    %120 = vmatprep.subr.mxu0 0.0
    %121 = vmatpush1.msra.mxu0 0.0
    %122 = vmatprep.subr.mxu0 0.0
    %123 = vmatpush1.msra.mxu0 0.0
    %124 = vmatprep.subr.mxu0 0.0
    %125 = vmatpush1.msra.mxu0 0.0
    %126 = vmatprep.subr.mxu0 0.0
    %127 = vmatpush1.msra.mxu0 0.0
    %128 = vmatprep.subr.mxu0 0.0
    %129 = vmatpush1.msra.mxu0 0.0
    %130 = vmatprep.subr.mxu0 0.0
    %131 = vmatpush1.msra.mxu0 0.0
    %132 = vmatprep.subr.mxu0 0.0
    %133 = vmatpush1.msra.mxu0 0.0
    %134 = vmatprep.subr.mxu0 0.0
    %135 = vmatpush1.msra.mxu0 0.0
    %136 = vmatprep.subr.mxu0 0.0
    %137 = vmatpush1.msra.mxu0 0.0
    %138 = vmatprep.subr.mxu0 0.0
    %139 = vmatpush1.msra.mxu0 0.0
    %140 = vmatprep.subr.mxu0 0.0
    %141 = vmatpush1.msra.mxu0 0.0
    %142 = vmatprep.subr.mxu0 0.0
    %143 = vmatpush1.msra.mxu0 0.0
    %144 = vmatprep.subr.mxu0 0.0
    %145 = vmatpush1.msra.mxu0 0.0
    %146 = vmatprep.mubr.f32.mxu0 0.0
    %147 = vmatmul.mubr.f32.gmra.mrb[0].mxu0 %v77
    %v148 = vpop.f32.mrb[0].mxu0
    %v149 = vadd.f32 %v73, %v148
    %v150 = vpop.f32.mrb[0].mxu0
    %151 = vmatprep.mubr.f32.mxu0 0.0
    %152 = vmatmul.mubr.f32.gmra.mrb[0].mxu0 %v80
    %v153 = vpop.f32.mrb[0].mxu0
    %v154 = vadd.f32 %v73, %v153
    %v155 = vpop.f32.mrb[0].mxu0
    %156 = vdwg.mxu0
    %157 = vst.msk [vmem:[#allocation8] sm:$0xff] %vm75, %v149
    %158 = vst.msk [vmem:[#allocation8 + $0x8] sm:$0xff] %vm75, %v154
    %v159 = vld [vmem:[#allocation7] sm:$0xff]
    %v160 = vld [vmem:[#allocation7 + $0x8] sm:$0xff]
    %v161 = vsub.f32 %v149, %v159
    %v162 = vsub.f32 %v154, %v160
    %s163 = smul.u32 0, 16
    %v164 = vlaneseq
    %v165 = vshrl.u32 %v164, 7
    %v166 = vadd.s32 %v165, 8
    %v167 = vstv %s163
    %v168 = vadd.s32 %v167, %v165
    %v169 = vadd.s32 %v167, %v166
    %vm170 = vcmp.lt.s32.totalorder %v168, 16
    %vm171 = vcmp.lt.s32.totalorder %v169, 16
    %v172 = vsel %vm170, %v161, 0.0
    %v173 = vsel %vm171, %v162, 0.0
    %v174 = vmul.f32 %v172, %v172
    %v175 = vmul.f32 %v173, %v173
    %v176 = vsel %vm75, %v174, 0.0
    %v177 = vsel %vm75, %v175, 0.0
    %v178 = vadd.f32 %v176, %v177
    %179 = vst.msk [vmem:[#allocation9] sm:$0xff] %vm75, %v178
    // Predicated region
    $region30: #{tpu_custom_call.1} parent=1 // pred_check
      _
    $region31: #{tpu_custom_call.1} parent=1 // pred_check_branch
      %181 = sbr.rel (0) target = $region33
    $region32: #{tpu_custom_call.1} parent=1 // pred_region
      %s183 = ssub.s32 256, 256
      %184 = vsyncadd [#allocation4], %s183
      %s185 = sshll.u32 [#allocation8], 4
      %s186 = int_to_ptr.vmem [resolvable:$true] %s185
      %191 = dma.vmem_to_hbm [thread:$0]  %s186, 256, %s4, [#allocation4], 128, 128, 8
    $region33: #{tpu_custom_call.1} parent=1 // pred_fallthru
      _
    // Predicated region
    $region34: #{tpu_custom_call.1} parent=1 // pred_check
      _
    $region35: #{tpu_custom_call.1} parent=1 // pred_check_branch
      %193 = sbr.rel (0) target = $region37
    $region36: #{tpu_custom_call.1} parent=1 // pred_region
      %s195 = ssub.s32 128, 128
      %196 = vsyncadd [#allocation10], %s195
      %s198 = sshll.u32 [#allocation9], 4
      %s199 = int_to_ptr.vmem [resolvable:$true] %s198
      %201 = dma.vmem_to_hbm [thread:$0]  %s199, 128, %s5, [#allocation10]
    $region37: #{tpu_custom_call.1} parent=1 // pred_fallthru
      _
    // Predicated region
    $region38: #{tpu_custom_call.1} parent=1 // pred_check
      _
    $region39: #{tpu_custom_call.1} parent=1 // pred_check_branch
      %203 = sbr.rel (0) target = $region41
    $region40: #{tpu_custom_call.1} parent=1 // pred_region
      %204 = dma.done [#allocation4], 256
    $region41: #{tpu_custom_call.1} parent=1 // pred_fallthru
      _
    // Predicated region
    $region42: #{tpu_custom_call.1} parent=1 // pred_check
      _
    $region43: #{tpu_custom_call.1} parent=1 // pred_check_branch
      %206 = sbr.rel (0) target = $region45
    $region44: #{tpu_custom_call.1} parent=1 // pred_region
      %207 = dma.done [#allocation10], 128
    $region45: #{tpu_custom_call.1} parent=1 // pred_fallthru
      _
    %208 = vsyncpa [#allocation3], 1
    %209 = vsyncpa [#allocation6], 1
    %210 = vsyncpa [#allocation4], 1
    %211 = vsyncpa [#allocation10], 1

</llo_original>
